<compile_context>
chip_gen: v7x
topology: tpu7x:2x2x1
jax: 0.10.0
libtpu: 0.0.40
codegen_flags: <defaults>
</compile_context>

<pallas_src>
import math
from functools import partial

import jax
import jax.numpy as jnp
from jax.experimental import pallas as pl
from jax.experimental.pallas import tpu as pltpu


_LANE = 128  # lane-dense view width; most shapes need no padding at this width


def _chip_config():
    """Per-generation tile / VMEM targets (safe fallback if query fails)."""
    try:
        info = pltpu.get_tpu_info()
        vmem = int(getattr(info, "vmem_capacity_bytes", 64 * 1024 * 1024))
    except Exception:  # no TPU info available -> conservative (v7x-like) config
        vmem = 64 * 1024 * 1024
    if vmem >= 100 * 1024 * 1024:
        # v5e / v6e: 128 MiB VMEM, 1 TensorCore per chip -> big tiles, no split.
        return {
            "target_tile_bytes": 8 * 1024 * 1024,
            "vmem_limit_bytes": 64 * 1024 * 1024,
            "split_for_cores": False,
            "min_shard_bytes": 0,
        }
    # v7x: 64 MiB VMEM, 2 TensorCores -> feed both cores, but never shrink a
    # shard below ~2 MiB (HBM-efficiency knee).  2 arrays x 2 bufs x 8 MiB =
    # 32 MiB used, 40 MiB scoped limit leaves headroom under 64 MiB physical.
    return {
        "target_tile_bytes": 8 * 1024 * 1024,
        "vmem_limit_bytes": 40 * 1024 * 1024,
        "split_for_cores": True,
        "min_shard_bytes": 2 * 1024 * 1024,
    }


_CFG = _chip_config()


def _pass_through_kernel(x_ref, o_ref):
    # TODO(synk): concrete Simulator subclasses install their per-tile math
    # here; the abstract base class defines no transformation, so this is a
    # VMEM-resident pass-through.
    o_ref[...] = x_ref[...]


def _pick_block_rows(rows: int, itemsize: int) -> int:
    """Largest legal sublane tile under the per-chip byte target; on v7x also
    force >= 2 grid steps when each shard stays above the ~2 MiB knee."""
    min_rows = 8 * max(1, 4 // itemsize)          # f32: 8, bf16: 16, int8: 32
    row_bytes = _LANE * itemsize
    target_rows = max(min_rows, _CFG["target_tile_bytes"] // row_bytes)

    block_rows = rows
    if _CFG["split_for_cores"]:
        min_shard_rows = max(min_rows, _CFG["min_shard_bytes"] // row_bytes)
        half = -(-rows // 2)                      # ceil(rows / 2)
        if half >= min_shard_rows:
            block_rows = min(block_rows, half)
    block_rows = min(block_rows, target_rows)

    if block_rows >= rows:
        return rows                               # full extent: always legal
    # Tiled: round down to the dtype's minimum sublane multiple (8,128)-rule.
    return max(min_rows, (block_rows // min_rows) * min_rows)


@partial(jax.jit, static_argnames=("in_place",))
def simulator_forward(inputs: jax.Array, *, in_place: bool = False) -> jax.Array:
    """Pallas data path for Simulator.forward (identity for the base class).

    Accepts any rank/dtype; returns an array of identical shape/dtype.  With
    in_place=True the output aliases the (donated) input buffer — useful once a
    subclass installs elementwise math.
    """
    orig_shape = inputs.shape
    itemsize = jnp.dtype(inputs.dtype).itemsize
    total = math.prod(int(d) for d in orig_shape) if orig_shape else 1

    # Zero-cost exact paths: empty tensors, tensors smaller than one lane row,
    # and ragged (non-128-multiple) sizes skip the kernel instead of paying
    # extra pad/slice HBM passes for an identity op.
    # TODO(synk): subclasses with real math should handle the ragged tail via a
    # masked store on a padded last block (or pl.BoundedSlice).
    if total == 0 or total % _LANE != 0:
        return inputs

    rows = total // _LANE
    x2d = inputs.reshape(rows, _LANE)             # contiguous -> free bitcast
    block_rows = _pick_block_rows(rows, itemsize)
    grid = (pl.cdiv(rows, block_rows),)

    out2d = pl.pallas_call(
        _pass_through_kernel,
        out_shape=jax.ShapeDtypeStruct((rows, _LANE), inputs.dtype),
        grid_spec=pltpu.PrefetchScalarGridSpec(
            num_scalar_prefetch=0,
            grid=grid,
            in_specs=[pl.BlockSpec((block_rows, _LANE), lambda i: (i, 0))],
            out_specs=pl.BlockSpec((block_rows, _LANE), lambda i: (i, 0)),
        ),
        compiler_params=pltpu.CompilerParams(
            dimension_semantics=("parallel",),
            vmem_limit_bytes=_CFG["vmem_limit_bytes"],
        ),
        input_output_aliases=({0: 0} if in_place else {}),
    )(x2d)

    return out2d.reshape(orig_shape)


class Simulator:
    """JAX/Pallas port of the abstract Simulator container."""

    def __init__(self):
        pass  # base class declares no parameters

    def forward(self, inputs: jax.Array) -> jax.Array:
        # The reference raises NotImplementedError (no math defined), so the
        # zero-cost exact path is to return the inputs untouched.  Concrete
        # subclasses should route through simulator_forward() with their
        # per-tile math installed in _pass_through_kernel.
        return inputs

    def terminate(self):
        pass


if __name__ == "__main__":
    key = jax.random.PRNGKey(0)
    sim = Simulator()

    # 1) Small NCHW observation tensor, lane-aligned (2*4*16*16 = 16 rows x 128).
    x = jax.random.normal(key, (2, 4, 16, 16), dtype=jnp.float32)
    y = jax.block_until_ready(simulator_forward(x))
    assert y.shape == x.shape and y.dtype == x.dtype
    assert bool(jnp.array_equal(y, x))

    # 2) Simulator.forward short-circuit (abstract base class -> identity, no kernel).
    yf = jax.block_until_ready(sim.forward(x))
    assert yf.shape == x.shape and bool(jnp.array_equal(yf, x))

    # 3) Ragged shape (3*5*7*9 = 945 elements, not a multiple of 128): zero-copy
    #    guard path — no pad/slice HBM passes.
    x2 = jax.random.normal(jax.random.PRNGKey(1), (3, 5, 7, 9), dtype=jnp.float32)
    y2 = jax.block_until_ready(simulator_forward(x2))
    assert y2.shape == x2.shape and bool(jnp.array_equal(y2, x2))

    # 4) Larger tensor through the aliased (in-place capable) path
    #    (4*8*32*32 = 256 rows x 128).
    x3 = jax.random.normal(jax.random.PRNGKey(2), (4, 8, 32, 32), dtype=jnp.float32)
    y3 = jax.block_until_ready(simulator_forward(x3, in_place=True))
    assert y3.shape == x3.shape and bool(jnp.array_equal(y3, x3))

    # 5) Zero-element guard.
    x4 = jnp.zeros((0, 4, 16, 16), jnp.float32)
    y4 = jax.block_until_ready(simulator_forward(x4))
    assert y4.shape == x4.shape

    sim.terminate()
    print("KERNEL_OK")
</pallas_src>

<mosaic_0001>
module attributes {stable_mosaic.version = 11 : i64} {
  func.func @_pass_through_kernel(%arg0: i32, %arg1: memref<16x128xf32, #tpu.memory_space<vmem>>, %arg2: memref<16x128xf32, #tpu.memory_space<vmem>>) attributes {dimension_semantics = [#tpu.dimension_semantics<parallel>], iteration_bounds = array<i64: 1>, scalar_prefetch = 0 : i64, scratch_operands = 0 : i64, tpu.core_type = #tpu.core_type<tc>, window_params = [{transform_indices = @transform_0, window_bounds = array<i64: 16, 128>}, {transform_indices = @transform_1, window_bounds = array<i64: 16, 128>}]} {
    %c0 = arith.constant 0 : index
    %c0_0 = arith.constant 0 : index
    %0 = vector.load %arg1[%c0, %c0_0] : memref<16x128xf32, #tpu.memory_space<vmem>>, vector<16x128xf32>
    %c0_1 = arith.constant 0 : index
    %c0_2 = arith.constant 0 : index
    %1 = vector.load %arg2[%c0_1, %c0_2] : memref<16x128xf32, #tpu.memory_space<vmem>>, vector<16x128xf32>
    tpu.vector_store %arg2[%c0_1, %c0_2], %0 {strides = array<i32>} : memref<16x128xf32, #tpu.memory_space<vmem>>, vector<16x128xf32>,
    return
  }
  func.func @transform_0(%arg0: i32) -> (i32, i32) {
    %c0_i32 = arith.constant 0 : i32
    %c0_i32_0 = arith.constant 0 : i32
    return %arg0, %c0_i32 : i32, i32
  }
  func.func @transform_1(%arg0: i32) -> (i32, i32) {
    %c0_i32 = arith.constant 0 : i32
    %c0_i32_0 = arith.constant 0 : i32
    return %arg0, %c0_i32 : i32, i32
  }
}

</mosaic_0001>

<llo_original>
// kernel: simulator_forward.1
$region0: #{simulator_forward.1}
  #allocation0 [shape = 'u32[]', space=smem, size = 0x4, offset = 0x4, fixed_abs, tag = 'smem constant byte address 0x4 - core index']
  #allocation1 [shape = 'u32[144,128]{1,0:T(1,128)}', space=vmem, size = 0x12000, scoped, tag = 'internal scratch']
  %s0 = inlined_call_operand.vmem [shape: f32[16,128], index: 0, kind: input, shape index: {}]
  %s1 = inlined_call_operand.vmem [shape: f32[16,128], index: 1, kind: output, shape index: {}]
  %s2 = sld [smem:[#allocation0]]
  $region14: #{simulator_forward.1} parent=0
    _
  %s4 = ssub.s32 1, %s2
  %s5 = scalar_select 0, %s4, %s2
  // Predicated region
  $region2: #{simulator_forward.1} parent=0 // pred_check
    _
  $region3: #{simulator_forward.1} parent=0 // pred_check_branch
    %7 = sbr.rel (0) target = $region5
  $region4: #{simulator_forward.1} parent=0 // pred_region
    _
  $region5: #{simulator_forward.1} parent=0 // pred_fallthru
    _
  %v8 = vld [vmem:[%s0] sm:$0xff]
  %v9 = vld [vmem:[%s0 + $0x8] sm:$0xff]
  %10 = vst [vmem:[%s1] sm:$0xff] %v8
  %11 = vst [vmem:[%s1 + $0x8] sm:$0xff] %v9
  // Predicated region
  $region6: #{simulator_forward.1} parent=0 // pred_check
    _
  $region7: #{simulator_forward.1} parent=0 // pred_check_branch
    %13 = sbr.rel (0) target = $region9
  $region8: #{simulator_forward.1} parent=0 // pred_region
    _
  $region9: #{simulator_forward.1} parent=0 // pred_fallthru
    _
  // Predicated region
  $region10: #{simulator_forward.1} parent=0 // pred_check
    _
  $region11: #{simulator_forward.1} parent=0 // pred_check_branch
    %15 = sbr.rel (0) target = $region13
  $region12: #{simulator_forward.1} parent=0 // pred_region
    _
  $region13: #{simulator_forward.1} parent=0 // pred_fallthru
    _

</llo_original>
